<compile_context>
chip_gen: v7x
topology: tpu7x:2x2x1
jax: 0.10.0
libtpu: 0.0.40
codegen_flags: <defaults>
</compile_context>

<pallas_src>
import jax
import jax.numpy as jnp
from jax.experimental import pallas as pl
from jax.experimental.pallas import tpu as pltpu

N_ACTIONS = 3
HIDDEN = 128


def _round_up(n, m):
    return ((n + m - 1) // m) * m


def _choose_batch_tiling(B, tile_b):
    """Adaptive batch tiling: minimal padding, even tile count for large B."""
    n = -(-B // tile_b)                      # ceil(B / tile_b)
    if B > tile_b:
        n = _round_up(n, 2)                  # feed both v7x TensorCores evenly
    tB = _round_up(-(-B // n), 16)           # 16: bf16 output sublane packing
    return n, tB, n * tB


def qnet_kernel(x_ref, w1_ref, b1_ref, w2_ref, b2_ref, w3_ref, b3_ref, o_ref):
    x = x_ref[...]          # (tB, 2)  f32
    w1 = w1_ref[...]        # (2, 128) f32

    # Layer 1 on the VPU: a K=2 matmul wastes >98% of the MXU, so it is two
    # broadcast FMAs. Kept fully f32 (v5e has no bf16 VALU).
    h1 = x[:, 0:1] * w1[0:1, :] + x[:, 1:2] * w1[1:2, :] + b1_ref[...]
    h1 = jnp.maximum(h1, 0.0)

    # Layer 2: (tB,128) @ (128,128) on the MXU, bf16 operands, f32 accumulate.
    h2 = jnp.dot(h1.astype(jnp.bfloat16), w2_ref[...],
                 preferred_element_type=jnp.float32) + b2_ref[...]
    h2 = jnp.maximum(h2, 0.0)

    # Layer 3: w3/b3 pre-padded to 128 lanes -> lane-dense, unmasked stores.
    out = jnp.dot(h2.astype(jnp.bfloat16), w3_ref[...],
                  preferred_element_type=jnp.float32) + b3_ref[...]
    o_ref[...] = out.astype(o_ref.dtype)     # bf16 writeback: 2x less HBM traffic


def qnet_forward(x, params, *, tile_b=4096):
    """x: [B, 2] f32 -> [B, 3] f32 (Q-values for 3 actions)."""
    w1, b1, w2, b2, w3p, b3p = params
    B, F_in = x.shape
    H = w2.shape[1]

    n_tiles, tB, B_pad = _choose_batch_tiling(B, tile_b)
    x_pad = x if B_pad == B else jnp.pad(x, ((0, B_pad - B), (0, 0)))

    out = pl.pallas_call(
        qnet_kernel,
        out_shape=jax.ShapeDtypeStruct((B_pad, H), jnp.bfloat16),
        grid=(n_tiles,),
        in_specs=[
            pl.BlockSpec((tB, F_in), lambda i: (i, 0)),   # x streamed per tile
            # Constant-index blocks: block index never changes across the grid,
            # so the pipeliner keeps them resident (no per-step re-DMA).
            pl.BlockSpec(w1.shape, lambda i: (0, 0)),
            pl.BlockSpec(b1.shape, lambda i: (0, 0)),
            pl.BlockSpec(w2.shape, lambda i: (0, 0)),
            pl.BlockSpec(b2.shape, lambda i: (0, 0)),
            pl.BlockSpec(w3p.shape, lambda i: (0, 0)),
            pl.BlockSpec(b3p.shape, lambda i: (0, 0)),
        ],
        out_specs=pl.BlockSpec((tB, H), lambda i: (i, 0)),
        compiler_params=pltpu.CompilerParams(
            dimension_semantics=("parallel",)),
    )(x_pad, w1, b1, w2, b2, w3p, b3p)

    # Drop batch padding and the zero-padded action lanes; return f32.
    return out[:B, :N_ACTIONS].astype(jnp.float32)


def init_params(key):
    """Deterministic init matching nn.Linear shapes (stored transposed)."""
    ks = jax.random.split(key, 6)

    def linear(kw, kb, fan_in, fan_out):
        # PyTorch nn.Linear default: U(-1/sqrt(fan_in), 1/sqrt(fan_in))
        bound = 1.0 / jnp.sqrt(jnp.float32(fan_in))
        w = jax.random.uniform(kw, (fan_in, fan_out), jnp.float32, -bound, bound)
        b = jax.random.uniform(kb, (1, fan_out), jnp.float32, -bound, bound)
        return w, b

    w1, b1 = linear(ks[0], ks[1], 2, HIDDEN)
    w2, b2 = linear(ks[2], ks[3], HIDDEN, HIDDEN)
    w3, b3 = linear(ks[4], ks[5], HIDDEN, N_ACTIONS)

    # Pre-pad the 3-wide output layer to a full 128-lane slab once, at init.
    w3p = jnp.zeros((HIDDEN, HIDDEN), jnp.float32).at[:, :N_ACTIONS].set(w3)
    b3p = jnp.zeros((1, HIDDEN), jnp.float32).at[:, :N_ACTIONS].set(b3)

    # Store MXU operands as bf16 (f32 accumulation happens in the kernel).
    return (w1, b1, w2.astype(jnp.bfloat16), b2, w3p.astype(jnp.bfloat16), b3p)


def qnet_reference(x, params):
    """Pure-JAX reference using the same (bf16-quantized) stored weights."""
    w1, b1, w2, b2, w3p, b3p = params
    h1 = jnp.maximum(x @ w1 + b1, 0.0)
    h2 = jnp.maximum(h1 @ w2.astype(jnp.float32) + b2, 0.0)
    out = h2 @ w3p.astype(jnp.float32) + b3p
    return out[:, :N_ACTIONS]


# TODO(synk): sample_action's epsilon-greedy (python `random`) stays host-side
# control flow around argmax(forward(obs)); an optional fused in-kernel argmax
# output is left out to keep the float Q-value output for the training path.

if __name__ == "__main__":
    key = jax.random.PRNGKey(0)
    kx, kx2, kp = jax.random.split(key, 3)
    params = init_params(kp)

    # bf16 MXU operands + bf16 output writeback -> loosened tolerance.
    ATOL = 2e-2
    RTOL = 2e-2

    # Tiny per-env-step batch (single-tile path, exercises batch padding 8->16).
    B_small = 8
    x_small = jax.random.normal(kx, (B_small, 2), dtype=jnp.float32)
    out_small = jax.block_until_ready(qnet_forward(x_small, params))
    ref_small = qnet_reference(x_small, params)
    assert out_small.shape == (B_small, N_ACTIONS), out_small.shape
    assert jnp.allclose(out_small, ref_small, atol=ATOL, rtol=RTOL), \
        "small-batch mismatch vs reference"

    # Larger batch: default tiling (520 -> one 528-row tile, ~1.5% padding).
    B_big = 520
    x_big = jax.random.normal(kx2, (B_big, 2), dtype=jnp.float32)
    out_big = jax.block_until_ready(qnet_forward(x_big, params))
    ref_big = qnet_reference(x_big, params)
    assert out_big.shape == (B_big, N_ACTIONS), out_big.shape
    assert jnp.allclose(out_big, ref_big, atol=ATOL, rtol=RTOL), \
        "batched mismatch vs reference"

    # Same batch with a small tile override: exercises the multi-step grid
    # (even tile count, adaptive tail sizing: 520 -> 6 tiles of 96 rows).
    out_multi = jax.block_until_ready(qnet_forward(x_big, params, tile_b=128))
    assert out_multi.shape == (B_big, N_ACTIONS), out_multi.shape
    assert jnp.allclose(out_multi, ref_big, atol=ATOL, rtol=RTOL), \
        "multi-tile mismatch vs reference"

    print("KERNEL_OK")
</pallas_src>

<mosaic_0001>
module attributes {stable_mosaic.version = 11 : i64} {
  func.func @qnet_kernel(%arg0: i32, %arg1: memref<16x2xf32, #tpu.memory_space<vmem>>, %arg2: memref<2x128xf32, #tpu.memory_space<vmem>>, %arg3: memref<1x128xf32, #tpu.memory_space<vmem>>, %arg4: memref<128x128xbf16, #tpu.memory_space<vmem>>, %arg5: memref<1x128xf32, #tpu.memory_space<vmem>>, %arg6: memref<128x128xbf16, #tpu.memory_space<vmem>>, %arg7: memref<1x128xf32, #tpu.memory_space<vmem>>, %arg8: memref<16x128xbf16, #tpu.memory_space<vmem>>) attributes {dimension_semantics = [#tpu.dimension_semantics<parallel>], iteration_bounds = array<i64: 1>, scalar_prefetch = 0 : i64, scratch_operands = 0 : i64, tpu.core_type = #tpu.core_type<tc>, window_params = [{transform_indices = @transform_0, window_bounds = array<i64: 16, 2>}, {pipeline_mode = #tpu.pipeline_mode<synchronous>, transform_indices = @transform_1, window_bounds = array<i64: 2, 128>}, {pipeline_mode = #tpu.pipeline_mode<synchronous>, transform_indices = @transform_2, window_bounds = array<i64: 1, 128>}, {pipeline_mode = #tpu.pipeline_mode<synchronous>, transform_indices = @transform_3, window_bounds = array<i64: 128, 128>}, {pipeline_mode = #tpu.pipeline_mode<synchronous>, transform_indices = @transform_4, window_bounds = array<i64: 1, 128>}, {pipeline_mode = #tpu.pipeline_mode<synchronous>, transform_indices = @transform_5, window_bounds = array<i64: 128, 128>}, {pipeline_mode = #tpu.pipeline_mode<synchronous>, transform_indices = @transform_6, window_bounds = array<i64: 1, 128>}, {transform_indices = @transform_7, window_bounds = array<i64: 16, 128>}]} {
    %c0 = arith.constant 0 : index
    %c0_0 = arith.constant 0 : index
    %0 = vector.load %arg1[%c0, %c0_0] : memref<16x2xf32, #tpu.memory_space<vmem>>, vector<16x2xf32>
    %c0_1 = arith.constant 0 : index
    %c0_2 = arith.constant 0 : index
    %1 = vector.load %arg2[%c0_1, %c0_2] : memref<2x128xf32, #tpu.memory_space<vmem>>, vector<2x128xf32>
    %2 = vector.extract_strided_slice %0 {offsets = [0, 0], sizes = [16, 1], strides = [1, 1]} : vector<16x2xf32> to vector<16x1xf32>
    %3 = vector.extract_strided_slice %1 {offsets = [0, 0], sizes = [1, 128], strides = [1, 1]} : vector<2x128xf32> to vector<1x128xf32>
    %4 = vector.broadcast %2 : vector<16x1xf32> to vector<16x128xf32>
    %5 = vector.broadcast %3 : vector<1x128xf32> to vector<16x128xf32>
    %6 = arith.mulf %4, %5 : vector<16x128xf32>
    %7 = vector.extract_strided_slice %0 {offsets = [0, 1], sizes = [16, 1], strides = [1, 1]} : vector<16x2xf32> to vector<16x1xf32>
    %8 = vector.extract_strided_slice %1 {offsets = [1, 0], sizes = [1, 128], strides = [1, 1]} : vector<2x128xf32> to vector<1x128xf32>
    %9 = vector.broadcast %7 : vector<16x1xf32> to vector<16x128xf32>
    %10 = vector.broadcast %8 : vector<1x128xf32> to vector<16x128xf32>
    %11 = arith.mulf %9, %10 : vector<16x128xf32>
    %12 = arith.addf %6, %11 : vector<16x128xf32>
    %c0_3 = arith.constant 0 : index
    %c0_4 = arith.constant 0 : index
    %13 = vector.load %arg3[%c0_3, %c0_4] : memref<1x128xf32, #tpu.memory_space<vmem>>, vector<1x128xf32>
    %14 = vector.broadcast %13 : vector<1x128xf32> to vector<16x128xf32>
    %15 = arith.addf %12, %14 : vector<16x128xf32>
    %cst = arith.constant 0.000000e+00 : f32
    %16 = vector.broadcast %cst : f32 to vector<16x128xf32>
    %17 = arith.maximumf %15, %16 : vector<16x128xf32>
    %18 = arith.truncf %17 : vector<16x128xf32> to vector<16x128xbf16>
    %c0_5 = arith.constant 0 : index
    %c0_6 = arith.constant 0 : index
    %19 = vector.load %arg4[%c0_5, %c0_6] : memref<128x128xbf16, #tpu.memory_space<vmem>>, vector<128x128xbf16>
    %cst_7 = arith.constant dense<0.000000e+00> : vector<16x128xf32>
    %20 = tpu.matmul %18, %19, %cst_7 {dimension_numbers = #tpu.dot_dimension_numbers<[1], [0], [0], [1], [0, 0, 1, 1], [], []>} : vector<16x128xbf16>, vector<128x128xbf16>, vector<16x128xf32> -> vector<16x128xf32>
    %c0_8 = arith.constant 0 : index
    %c0_9 = arith.constant 0 : index
    %21 = vector.load %arg5[%c0_8, %c0_9] : memref<1x128xf32, #tpu.memory_space<vmem>>, vector<1x128xf32>
    %22 = vector.broadcast %21 : vector<1x128xf32> to vector<16x128xf32>
    %23 = arith.addf %20, %22 : vector<16x128xf32>
    %cst_10 = arith.constant 0.000000e+00 : f32
    %24 = vector.broadcast %cst_10 : f32 to vector<16x128xf32>
    %25 = arith.maximumf %23, %24 : vector<16x128xf32>
    %26 = arith.truncf %25 : vector<16x128xf32> to vector<16x128xbf16>
    %c0_11 = arith.constant 0 : index
    %c0_12 = arith.constant 0 : index
    %27 = vector.load %arg6[%c0_11, %c0_12] : memref<128x128xbf16, #tpu.memory_space<vmem>>, vector<128x128xbf16>
    %cst_13 = arith.constant dense<0.000000e+00> : vector<16x128xf32>
    %28 = tpu.matmul %26, %27, %cst_13 {dimension_numbers = #tpu.dot_dimension_numbers<[1], [0], [0], [1], [0, 0, 1, 1], [], []>} : vector<16x128xbf16>, vector<128x128xbf16>, vector<16x128xf32> -> vector<16x128xf32>
    %c0_14 = arith.constant 0 : index
    %c0_15 = arith.constant 0 : index
    %29 = vector.load %arg7[%c0_14, %c0_15] : memref<1x128xf32, #tpu.memory_space<vmem>>, vector<1x128xf32>
    %30 = vector.broadcast %29 : vector<1x128xf32> to vector<16x128xf32>
    %31 = arith.addf %28, %30 : vector<16x128xf32>
    %32 = arith.truncf %31 : vector<16x128xf32> to vector<16x128xbf16>
    %c0_16 = arith.constant 0 : index
    %c0_17 = arith.constant 0 : index
    %33 = vector.load %arg8[%c0_16, %c0_17] : memref<16x128xbf16, #tpu.memory_space<vmem>>, vector<16x128xbf16>
    tpu.vector_store %arg8[%c0_16, %c0_17], %32 {strides = array<i32>} : memref<16x128xbf16, #tpu.memory_space<vmem>>, vector<16x128xbf16>,
    return
  }
  func.func @transform_0(%arg0: i32) -> (i32, i32) {
    %c0_i32 = arith.constant 0 : i32
    %c0_i32_0 = arith.constant 0 : i32
    return %arg0, %c0_i32 : i32, i32
  }
  func.func @transform_1(%arg0: i32) -> (i32, i32) {
    %c0_i32 = arith.constant 0 : i32
    %c0_i32_0 = arith.constant 0 : i32
    %c0_i32_1 = arith.constant 0 : i32
    return %c0_i32, %c0_i32_0 : i32, i32
  }
  func.func @transform_2(%arg0: i32) -> (i32, i32) {
    %c0_i32 = arith.constant 0 : i32
    %c0_i32_0 = arith.constant 0 : i32
    %c0_i32_1 = arith.constant 0 : i32
    return %c0_i32, %c0_i32_0 : i32, i32
  }
  func.func @transform_3(%arg0: i32) -> (i32, i32) {
    %c0_i32 = arith.constant 0 : i32
    %c0_i32_0 = arith.constant 0 : i32
    %c0_i32_1 = arith.constant 0 : i32
    return %c0_i32, %c0_i32_0 : i32, i32
  }
  func.func @transform_4(%arg0: i32) -> (i32, i32) {
    %c0_i32 = arith.constant 0 : i32
    %c0_i32_0 = arith.constant 0 : i32
    %c0_i32_1 = arith.constant 0 : i32
    return %c0_i32, %c0_i32_0 : i32, i32
  }
  func.func @transform_5(%arg0: i32) -> (i32, i32) {
    %c0_i32 = arith.constant 0 : i32
    %c0_i32_0 = arith.constant 0 : i32
    %c0_i32_1 = arith.constant 0 : i32
    return %c0_i32, %c0_i32_0 : i32, i32
  }
  func.func @transform_6(%arg0: i32) -> (i32, i32) {
    %c0_i32 = arith.constant 0 : i32
    %c0_i32_0 = arith.constant 0 : i32
    %c0_i32_1 = arith.constant 0 : i32
    return %c0_i32, %c0_i32_0 : i32, i32
  }
  func.func @transform_7(%arg0: i32) -> (i32, i32) {
    %c0_i32 = arith.constant 0 : i32
    %c0_i32_0 = arith.constant 0 : i32
    return %arg0, %c0_i32 : i32, i32
  }
}

</mosaic_0001>

<llo_original>
// kernel: tpu_custom_call.1
$region0: #{tpu_custom_call.1}
  #allocation0 [shape = 'u32[]', space=smem, size = 0x4, offset = 0x4, fixed_abs, tag = 'smem constant byte address 0x4 - core index']
  #allocation1 [shape = 'u32[144,128]{1,0:T(1,128)}', space=vmem, size = 0x12000, scoped, tag = 'internal scratch']
  %s0 = inlined_call_operand.vmem [shape: f32[16,2], index: 0, kind: input, shape index: {}]
  %s1 = inlined_call_operand.vmem [shape: f32[2,128], index: 1, kind: input, shape index: {}]
  %s2 = inlined_call_operand.vmem [shape: f32[1,128], index: 2, kind: input, shape index: {}]
  %s3 = inlined_call_operand.hbm [shape: bf16[128,128], index: 3, kind: input, shape index: {}]
  %s4 = inlined_call_operand.vmem [shape: f32[1,128], index: 4, kind: input, shape index: {}]
  %s5 = inlined_call_operand.hbm [shape: bf16[128,128], index: 5, kind: input, shape index: {}]
  %s6 = inlined_call_operand.vmem [shape: f32[1,128], index: 6, kind: input, shape index: {}]
  %s7 = inlined_call_operand.hbm [shape: bf16[16,128], index: 7, kind: output, shape index: {}]
  %s8 = sld [smem:[#allocation0]]
  $region46: #{tpu_custom_call.1} parent=0
    _
  %s10 = ssub.s32 1, %s8
  %s11 = scalar_select 0, %s10, %s8
  $region1: #{tpu_custom_call.1} parent=0
    #allocation2 [shape = 'u8[32768]{0}', space=vmem, size = 0x8000, scoped, tag = 'input window, operand 3, single buffered']
    #allocation3 [shape = 's32[1]{0}', space=sflag, size = 0x4, scoped, tag = 'scoped memory for tpu_custom_call.1']
    #allocation4 [shape = 's32[1]{0}', space=sflag, size = 0x4, scoped, tag = 'scoped memory for tpu_custom_call.1']
    #allocation5 [shape = 'u8[32768]{0}', space=vmem, size = 0x8000, scoped, tag = 'input window, operand 5, single buffered']
    #allocation6 [shape = 's32[1]{0}', space=sflag, size = 0x4, scoped, tag = 'scoped memory for tpu_custom_call.1']
    #allocation7 [shape = 'u8[4096]{0}', space=vmem, size = 0x1000, scoped, tag = 'output window, operand 0, single buffered']
    %12 = vsyncpa [#allocation3], 0
    %13 = vsyncpa [#allocation6], 0
    %14 = vsyncpa [#allocation4], 0
    // Predicated region
    $region2: #{tpu_custom_call.1} parent=1 // pred_check
      _
    $region3: #{tpu_custom_call.1} parent=1 // pred_check_branch
      %16 = sbr.rel (0) target = $region5
    $region4: #{tpu_custom_call.1} parent=1 // pred_region
      _
    $region5: #{tpu_custom_call.1} parent=1 // pred_fallthru
      _
    // Predicated region
    $region6: #{tpu_custom_call.1} parent=1 // pred_check
      _
    $region7: #{tpu_custom_call.1} parent=1 // pred_check_branch
      %18 = sbr.rel (0) target = $region9
    $region8: #{tpu_custom_call.1} parent=1 // pred_region
      _
    $region9: #{tpu_custom_call.1} parent=1 // pred_fallthru
      _
    // Predicated region
    $region10: #{tpu_custom_call.1} parent=1 // pred_check
      _
    $region11: #{tpu_custom_call.1} parent=1 // pred_check_branch
      %20 = sbr.rel (0) target = $region13
    $region12: #{tpu_custom_call.1} parent=1 // pred_region
      _
    $region13: #{tpu_custom_call.1} parent=1 // pred_fallthru
      _
    // Predicated region
    $region14: #{tpu_custom_call.1} parent=1 // pred_check
      _
    $region15: #{tpu_custom_call.1} parent=1 // pred_check_branch
      %22 = sbr.rel (0) target = $region17
    $region16: #{tpu_custom_call.1} parent=1 // pred_region
      %s24 = ssub.s32 1024, 1024
      %25 = vsyncadd [#allocation3], %s24
      %s26 = sshll.u32 [#allocation2], 4
      %s27 = int_to_ptr.vmem [resolvable:$true] %s26
      %32 = dma.hbm_to_vmem [thread:$0]  %s3, 1024, %s27, [#allocation3], 64, 64, 4
    $region17: #{tpu_custom_call.1} parent=1 // pred_fallthru
      _
    // Predicated region
    $region18: #{tpu_custom_call.1} parent=1 // pred_check
      _
    $region19: #{tpu_custom_call.1} parent=1 // pred_check_branch
      %34 = sbr.rel (0) target = $region21
    $region20: #{tpu_custom_call.1} parent=1 // pred_region
      _
    $region21: #{tpu_custom_call.1} parent=1 // pred_fallthru
      _
    // Predicated region
    $region22: #{tpu_custom_call.1} parent=1 // pred_check
      _
    $region23: #{tpu_custom_call.1} parent=1 // pred_check_branch
      %36 = sbr.rel (0) target = $region25
    $region24: #{tpu_custom_call.1} parent=1 // pred_region
      %s38 = ssub.s32 1024, 1024
      %39 = vsyncadd [#allocation6], %s38
      %s40 = sshll.u32 [#allocation5], 4
      %s41 = int_to_ptr.vmem [resolvable:$true] %s40
      %46 = dma.hbm_to_vmem [thread:$0]  %s5, 1024, %s41, [#allocation6], 64, 64, 4
    $region25: #{tpu_custom_call.1} parent=1 // pred_fallthru
      _
    // Predicated region
    $region26: #{tpu_custom_call.1} parent=1 // pred_check
      _
    $region27: #{tpu_custom_call.1} parent=1 // pred_check_branch
      %48 = sbr.rel (0) target = $region29
    $region28: #{tpu_custom_call.1} parent=1 // pred_region
      _
    $region29: #{tpu_custom_call.1} parent=1 // pred_fallthru
      _
    // Predicated region
    $region30: #{tpu_custom_call.1} parent=1 // pred_check
      _
    $region31: #{tpu_custom_call.1} parent=1 // pred_check_branch
      %50 = sbr.rel (0) target = $region33
    $region32: #{tpu_custom_call.1} parent=1 // pred_region
      %51 = dma.done [#allocation3], 1024
    $region33: #{tpu_custom_call.1} parent=1 // pred_fallthru
      _
    // Predicated region
    $region34: #{tpu_custom_call.1} parent=1 // pred_check
      _
    $region35: #{tpu_custom_call.1} parent=1 // pred_check_branch
      %53 = sbr.rel (0) target = $region37
    $region36: #{tpu_custom_call.1} parent=1 // pred_region
      %54 = dma.done [#allocation6], 1024
    $region37: #{tpu_custom_call.1} parent=1 // pred_fallthru
      _
    %v56 = vld [vmem:[%s0] sm:$0xff]
    %v57 = vld [vmem:[%s0 + $0x8] sm:$0xff]
    %v58 = vld [vmem:[%s1] sm:$0x3]
    %60 = vset.pattern.permute.xlu0 0
    %61 = vperm.xlu0 %60, %v56
    %v62 = vpop.permute.xlu0 %61
    %65 = vset.pattern.permute.xlu0 0
    %66 = vperm.xlu0 %65, %v57
    %v67 = vpop.permute.xlu0 %66
    %v69 = vlaneseq
    %v70 = vshrl.u32 %v69, 7
    %v71 = vsub.s32 0, %v70
    %v72 = vrot.slane %v58, %v71
    %v73 = vmul.f32 %v62, %v72
    %v74 = vmul.f32 %v67, %v72
    %75 = vset.pattern.permute.xlu0 1
    %76 = vperm.xlu0 %75, %v56
    %v77 = vpop.permute.xlu0 %76
    %79 = vset.pattern.permute.xlu0 1
    %80 = vperm.xlu0 %79, %v57
    %v81 = vpop.permute.xlu0 %80
    %v83 = vlaneseq
    %v84 = vshrl.u32 %v83, 7
    %v85 = vsub.s32 1, %v84
    %v86 = vrot.slane %v58, %v85
    %v87 = vmul.f32 %v77, %v86
    %v88 = vmul.f32 %v81, %v86
    %v89 = vadd.f32 %v73, %v87
    %v90 = vadd.f32 %v74, %v88
    %v91 = vld [vmem:[%s2] sm:$0x1]
    %v93 = vlaneseq
    %v94 = vshrl.u32 %v93, 7
    %v95 = vsub.s32 0, %v94
    %v96 = vrot.slane %v91, %v95
    %v98 = vadd.f32 %v89, %v96
    %v99 = vadd.f32 %v90, %v96
    %v100 = vmax.f32 %v98, 0.0
    %v101 = vmax.f32 %v99, 0.0
    %v102 = vpack.c.bf16 %v101, %v100
    %v103 = vld [vmem:[#allocation2] sm:$0xf]
    %v104 = vld [vmem:[#allocation2 + $0x4] sm:$0xf]
    %v105 = vld [vmem:[#allocation2 + $0x8] sm:$0xf]
    %v106 = vld [vmem:[#allocation2 + $0xc] sm:$0xf]
    %v107 = vld [vmem:[#allocation2 + $0x10] sm:$0xf]
    %v108 = vld [vmem:[#allocation2 + $0x14] sm:$0xf]
    %v109 = vld [vmem:[#allocation2 + $0x18] sm:$0xf]
    %v110 = vld [vmem:[#allocation2 + $0x1c] sm:$0xf]
    %v111 = vld [vmem:[#allocation2 + $0x20] sm:$0xf]
    %v112 = vld [vmem:[#allocation2 + $0x24] sm:$0xf]
    %v113 = vld [vmem:[#allocation2 + $0x28] sm:$0xf]
    %v114 = vld [vmem:[#allocation2 + $0x2c] sm:$0xf]
    %v115 = vld [vmem:[#allocation2 + $0x30] sm:$0xf]
    %v116 = vld [vmem:[#allocation2 + $0x34] sm:$0xf]
    %v117 = vld [vmem:[#allocation2 + $0x38] sm:$0xf]
    %v118 = vld [vmem:[#allocation2 + $0x3c] sm:$0xf]
    %v119 = vld [vmem:[%s4] sm:$0x1]
    %v121 = vlaneseq
    %v122 = vshrl.u32 %v121, 7
    %v123 = vsub.s32 0, %v122
    %v124 = vrot.slane %v119, %v123
    %v142 = vunpack.c.l.b16 %v103
    %v143 = vunpack.c.l.b16 %v104
    %v144 = vunpack.c.l.b16 %v105
    %v145 = vunpack.c.l.b16 %v106
    %v146 = vunpack.c.l.b16 %v107
    %v147 = vunpack.c.l.b16 %v108
    %v148 = vunpack.c.l.b16 %v109
    %v149 = vunpack.c.l.b16 %v110
    %v150 = vunpack.c.l.b16 %v111
    %v151 = vunpack.c.l.b16 %v112
    %v152 = vunpack.c.l.b16 %v113
    %v153 = vunpack.c.l.b16 %v114
    %v154 = vunpack.c.l.b16 %v115
    %v155 = vunpack.c.l.b16 %v116
    %v156 = vunpack.c.l.b16 %v117
    %v157 = vunpack.c.l.b16 %v118
    %v158 = vpack.c.b16 %v143, %v142
    %v159 = vpack.c.b16 %v145, %v144
    %v160 = vpack.c.b16 %v147, %v146
    %v161 = vpack.c.b16 %v149, %v148
    %v162 = vpack.c.b16 %v151, %v150
    %v163 = vpack.c.b16 %v153, %v152
    %v164 = vpack.c.b16 %v155, %v154
    %v165 = vpack.c.b16 %v157, %v156
    %174 = vmatprep.subr.bf16.mxu0 0
    %175 = vmatpush1.bf16.msra.mxu0 %v158
    %176 = vmatprep.subr.bf16.mxu0 0
    %177 = vmatpush1.bf16.msra.mxu0 %v159
    %178 = vmatprep.subr.bf16.mxu0 0
    %179 = vmatpush1.bf16.msra.mxu0 %v160
    %180 = vmatprep.subr.bf16.mxu0 0
    %181 = vmatpush1.bf16.msra.mxu0 %v161
    %182 = vmatprep.subr.bf16.mxu0 0
    %183 = vmatpush1.bf16.msra.mxu0 %v162
    %184 = vmatprep.subr.bf16.mxu0 0
    %185 = vmatpush1.bf16.msra.mxu0 %v163
    %186 = vmatprep.subr.bf16.mxu0 0
    %187 = vmatpush1.bf16.msra.mxu0 %v164
    %188 = vmatprep.subr.bf16.mxu0 0
    %189 = vmatpush1.bf16.msra.mxu0 %v165
    %190 = vmatprep.subr.bf16.mxu0 0
    %191 = vmatpush1.bf16.msra.mxu0 0
    %192 = vmatprep.subr.bf16.mxu0 0
    %193 = vmatpush1.bf16.msra.mxu0 0
    %194 = vmatprep.subr.bf16.mxu0 0
    %195 = vmatpush1.bf16.msra.mxu0 0
    %196 = vmatprep.subr.bf16.mxu0 0
    %197 = vmatpush1.bf16.msra.mxu0 0
    %198 = vmatprep.subr.bf16.mxu0 0
    %199 = vmatpush1.bf16.msra.mxu0 0
    %200 = vmatprep.subr.bf16.mxu0 0
    %201 = vmatpush1.bf16.msra.mxu0 0
    %202 = vmatprep.subr.bf16.mxu0 0
    %203 = vmatpush1.bf16.msra.mxu0 0
    %204 = vmatprep.subr.bf16.mxu0 0
    %205 = vmatpush1.bf16.msra.mxu0 0
    %206 = vmatprep.mubr.bf16.mxu0 0
    %207 = vmatmul.mubr.bf16.gmra.mrb[0].mxu0 %v102
    %v208 = vpop.f32.mrb[0].mxu0
    %v209 = vadd.f32 %v124, %v208
    %v210 = vpop.f32.mrb[0].mxu0
    %v211 = vpop.f32.mrb[0].mxu0
    %v212 = vadd.f32 %v124, %v211
    %v213 = vpop.f32.mrb[0].mxu0
    %214 = vdwg.mxu0
    %v215 = vmax.f32 %v209, 0.0
    %v216 = vmax.f32 %v212, 0.0
    %v217 = vpack.c.bf16 %v216, %v215
    %v218 = vld [vmem:[#allocation5] sm:$0xf]
    %v219 = vld [vmem:[#allocation5 + $0x4] sm:$0xf]
    %v220 = vld [vmem:[#allocation5 + $0x8] sm:$0xf]
    %v221 = vld [vmem:[#allocation5 + $0xc] sm:$0xf]
    %v222 = vld [vmem:[#allocation5 + $0x10] sm:$0xf]
    %v223 = vld [vmem:[#allocation5 + $0x14] sm:$0xf]
    %v224 = vld [vmem:[#allocation5 + $0x18] sm:$0xf]
    %v225 = vld [vmem:[#allocation5 + $0x1c] sm:$0xf]
    %v226 = vld [vmem:[#allocation5 + $0x20] sm:$0xf]
    %v227 = vld [vmem:[#allocation5 + $0x24] sm:$0xf]
    %v228 = vld [vmem:[#allocation5 + $0x28] sm:$0xf]
    %v229 = vld [vmem:[#allocation5 + $0x2c] sm:$0xf]
    %v230 = vld [vmem:[#allocation5 + $0x30] sm:$0xf]
    %v231 = vld [vmem:[#allocation5 + $0x34] sm:$0xf]
    %v232 = vld [vmem:[#allocation5 + $0x38] sm:$0xf]
    %v233 = vld [vmem:[#allocation5 + $0x3c] sm:$0xf]
    %v234 = vld [vmem:[%s6] sm:$0x1]
    %v236 = vlaneseq
    %v237 = vshrl.u32 %v236, 7
    %v238 = vsub.s32 0, %v237
    %v239 = vrot.slane %v234, %v238
    %v257 = vunpack.c.l.b16 %v218
    %v258 = vunpack.c.l.b16 %v219
    %v259 = vunpack.c.l.b16 %v220
    %v260 = vunpack.c.l.b16 %v221
    %v261 = vunpack.c.l.b16 %v222
    %v262 = vunpack.c.l.b16 %v223
    %v263 = vunpack.c.l.b16 %v224
    %v264 = vunpack.c.l.b16 %v225
    %v265 = vunpack.c.l.b16 %v226
    %v266 = vunpack.c.l.b16 %v227
    %v267 = vunpack.c.l.b16 %v228
    %v268 = vunpack.c.l.b16 %v229
    %v269 = vunpack.c.l.b16 %v230
    %v270 = vunpack.c.l.b16 %v231
    %v271 = vunpack.c.l.b16 %v232
    %v272 = vunpack.c.l.b16 %v233
    %v273 = vpack.c.b16 %v258, %v257
    %v274 = vpack.c.b16 %v260, %v259
    %v275 = vpack.c.b16 %v262, %v261
    %v276 = vpack.c.b16 %v264, %v263
    %v277 = vpack.c.b16 %v266, %v265
    %v278 = vpack.c.b16 %v268, %v267
    %v279 = vpack.c.b16 %v270, %v269
    %v280 = vpack.c.b16 %v272, %v271
    %289 = vmatprep.subr.bf16.mxu0 0
    %290 = vmatpush1.bf16.msra.mxu0 %v273
    %291 = vmatprep.subr.bf16.mxu0 0
    %292 = vmatpush1.bf16.msra.mxu0 %v274
    %293 = vmatprep.subr.bf16.mxu0 0
    %294 = vmatpush1.bf16.msra.mxu0 %v275
    %295 = vmatprep.subr.bf16.mxu0 0
    %296 = vmatpush1.bf16.msra.mxu0 %v276
    %297 = vmatprep.subr.bf16.mxu0 0
    %298 = vmatpush1.bf16.msra.mxu0 %v277
    %299 = vmatprep.subr.bf16.mxu0 0
    %300 = vmatpush1.bf16.msra.mxu0 %v278
    %301 = vmatprep.subr.bf16.mxu0 0
    %302 = vmatpush1.bf16.msra.mxu0 %v279
    %303 = vmatprep.subr.bf16.mxu0 0
    %304 = vmatpush1.bf16.msra.mxu0 %v280
    %305 = vmatprep.subr.bf16.mxu0 0
    %306 = vmatpush1.bf16.msra.mxu0 0
    %307 = vmatprep.subr.bf16.mxu0 0
    %308 = vmatpush1.bf16.msra.mxu0 0
    %309 = vmatprep.subr.bf16.mxu0 0
    %310 = vmatpush1.bf16.msra.mxu0 0
    %311 = vmatprep.subr.bf16.mxu0 0
    %312 = vmatpush1.bf16.msra.mxu0 0
    %313 = vmatprep.subr.bf16.mxu0 0
    %314 = vmatpush1.bf16.msra.mxu0 0
    %315 = vmatprep.subr.bf16.mxu0 0
    %316 = vmatpush1.bf16.msra.mxu0 0
    %317 = vmatprep.subr.bf16.mxu0 0
    %318 = vmatpush1.bf16.msra.mxu0 0
    %319 = vmatprep.subr.bf16.mxu0 0
    %320 = vmatpush1.bf16.msra.mxu0 0
    %321 = vmatprep.mubr.bf16.mxu0 0
    %322 = vmatmul.mubr.bf16.gmra.mrb[0].mxu0 %v217
    %v323 = vpop.f32.mrb[0].mxu0
    %v324 = vadd.f32 %v239, %v323
    %v325 = vpop.f32.mrb[0].mxu0
    %v326 = vpop.f32.mrb[0].mxu0
    %v327 = vadd.f32 %v239, %v326
    %v328 = vpop.f32.mrb[0].mxu0
    %329 = vdwg.mxu0
    %v330 = vpack.c.bf16 %v327, %v324
    %v332 = vunpack.c.l.b16 %v330
    %v333 = vunpack.c.h.b16 %v330
    %v334 = vpack.c.b16 %v332, %v332
    %v335 = vpack.c.b16 %v333, %v333
    %338 = vst [vmem:[#allocation7] sm:$0xf] %v334
    %339 = vst [vmem:[#allocation7 + $0x4] sm:$0xf] %v335
    // Predicated region
    $region38: #{tpu_custom_call.1} parent=1 // pred_check
      _
    $region39: #{tpu_custom_call.1} parent=1 // pred_check_branch
      %341 = sbr.rel (0) target = $region41
    $region40: #{tpu_custom_call.1} parent=1 // pred_region
      %s343 = ssub.s32 128, 128
      %344 = vsyncadd [#allocation4], %s343
      %s345 = sshll.u32 [#allocation7], 4
      %s346 = int_to_ptr.vmem [resolvable:$true] %s345
      %351 = dma.vmem_to_hbm [thread:$0]  %s346, 128, %s7, [#allocation4], 64, 64, 4
    $region41: #{tpu_custom_call.1} parent=1 // pred_fallthru
      _
    // Predicated region
    $region42: #{tpu_custom_call.1} parent=1 // pred_check
      _
    $region43: #{tpu_custom_call.1} parent=1 // pred_check_branch
      %353 = sbr.rel (0) target = $region45
    $region44: #{tpu_custom_call.1} parent=1 // pred_region
      %354 = dma.done [#allocation4], 128
    $region45: #{tpu_custom_call.1} parent=1 // pred_fallthru
      _
    %355 = vsyncpa [#allocation3], 1
    %356 = vsyncpa [#allocation6], 1
    %357 = vsyncpa [#allocation4], 1

</llo_original>
